<compile_context>
chip_gen: v6e
topology: v6e:2x2x1
jax: 0.10.0
libtpu: 0.0.40
codegen_flags: <defaults>
</compile_context>

<pallas_src>
import jax
import jax.numpy as jnp
from jax.experimental import pallas as pl
from jax.experimental.pallas import tpu as pltpu


def variance_kernel(xw_ref, w1_ref, b1_ref, w2_ref, b2_ref, wf_ref, bf_ref, o_ref):
    """Three matmuls + ReLU + softplus on a (TB, ...) batch tile."""
    xw = xw_ref[...]                                                  # (TB, L1*2*Cin)
    h = jnp.dot(xw, w1_ref[...], preferred_element_type=jnp.float32) + b1_ref[...]
    h = jnp.maximum(h, 0.0)                                           # (TB, L1*F1)
    g = jnp.dot(h, w2_ref[...], preferred_element_type=jnp.float32) + b2_ref[...]
    g = jnp.maximum(g, 0.0)                                           # (TB, L2*F2)
    z = jnp.dot(g, wf_ref[...], preferred_element_type=jnp.float32) + bf_ref[...]
    o_ref[...] = jnp.logaddexp(z, 0.0) + 1e-6                         # softplus + 1e-6


def _round_up(n, m):
    return ((n + m - 1) // m) * m


def variance_model_forward(x_ncl, params, *, block_b=512):
    """Layout / parameter folding in plain JAX, hot path in the Pallas kernel."""
    B, Cin, T = x_ncl.shape
    assert T >= 3, "VarianceModel requires time_steps >= 3 (fc expects L2 >= 1)"
    F1 = params["conv1_b"].shape[0]
    F2 = params["conv2_b"].shape[0]
    L1, L2 = T - 1, T - 2
    eps = 1e-5

    # ---- fold BatchNorm (eval) + conv bias into the conv weights ----
    s1 = params["bn1_gamma"] / jnp.sqrt(params["bn1_var"] + eps)
    t1 = params["bn1_beta"] - params["bn1_mean"] * s1
    s2 = params["bn2_gamma"] / jnp.sqrt(params["bn2_var"] + eps)
    t2 = params["bn2_beta"] - params["bn2_mean"] * s2

    # torch conv weight (Cout, Cin, K) -> (K*Cin, Cout), columns scaled by BN
    w1 = jnp.transpose(params["conv1_w"], (2, 1, 0)).reshape(2 * Cin, F1) * s1[None, :]
    b1 = params["conv1_b"] * s1 + t1                                  # (F1,)
    w2 = jnp.transpose(params["conv2_w"], (2, 1, 0)).reshape(2 * F1, F2) * s2[None, :]
    b2 = params["conv2_b"] * s2 + t2                                  # (F2,)

    # conv1 over all L1 positions as one block-diagonal matmul
    w1b = jnp.zeros((L1 * 2 * Cin, L1 * F1), jnp.float32)
    for t in range(L1):
        w1b = w1b.at[t * 2 * Cin:(t + 1) * 2 * Cin, t * F1:(t + 1) * F1].set(w1)
    b1f = jnp.tile(b1, L1)[None, :]                                   # (1, L1*F1)

    # conv2 over all L2 positions as one banded matmul on position-major h_flat
    w2b = jnp.zeros((L1 * F1, L2 * F2), jnp.float32)
    for t in range(L2):
        for k in range(2):
            w2b = w2b.at[(t + k) * F1:(t + k + 1) * F1,
                         t * F2:(t + 1) * F2].set(w2[k * F1:(k + 1) * F1, :])
    b2f = jnp.tile(b2, L2)[None, :]                                   # (1, L2*F2)

    # fc: torch flat index c*L2 + l  ->  our position-major index l*F2 + c
    wf = jnp.transpose(params["fc_w"][0].reshape(F2, L2), (1, 0)).reshape(L2 * F2, 1)
    bf = params["fc_b"].reshape(1, 1)

    # ---- im2col: 2-D channel-last window matrix (B, L1*2*Cin) ----
    x_tl = jnp.transpose(x_ncl, (0, 2, 1)).astype(jnp.float32)        # (B, T, Cin)
    xw = jnp.concatenate(
        [x_tl[:, t:t + 2, :].reshape(B, 2 * Cin) for t in range(L1)], axis=-1)

    # ---- batch tiling: tile rows multiple of 8, pad B up to a tile multiple ----
    TB = _round_up(min(block_b, _round_up(B, 8)), 8)
    Bp = _round_up(B, TB)
    if Bp != B:
        xw = jnp.pad(xw, ((0, Bp - B), (0, 0)))

    D_in, D_h, D_g = L1 * 2 * Cin, L1 * F1, L2 * F2
    full = lambda shape: pl.BlockSpec(shape, lambda i: (0, 0))        # resident params

    out = pl.pallas_call(
        variance_kernel,
        out_shape=jax.ShapeDtypeStruct((Bp, 1), jnp.float32),
        grid=(Bp // TB,),
        in_specs=[
            pl.BlockSpec((TB, D_in), lambda i: (i, 0)),               # im2col batch tile
            full((D_in, D_h)),                                        # w1 block-diag
            full((1, D_h)),                                           # folded bias 1
            full((D_h, D_g)),                                         # w2 banded
            full((1, D_g)),                                           # folded bias 2
            full((D_g, 1)),                                           # fc weight
            full((1, 1)),                                             # fc bias
        ],
        out_specs=pl.BlockSpec((TB, 1), lambda i: (i, 0)),
        compiler_params=pltpu.CompilerParams(
            dimension_semantics=("parallel",)),
    )(xw, w1b, b1f, w2b, b2f, wf, bf)
    return out[:B]


def reference_forward(x_ncl, params):
    """Pure-JAX reference mirroring the PyTorch forward (eval-mode BN)."""
    eps = 1e-5

    def conv1d(x, w, b):                     # x (B,C,T), w (O,C,K)
        K = w.shape[2]
        outs = [jnp.einsum("bck,ock->bo", x[:, :, t:t + K], w) + b
                for t in range(x.shape[2] - K + 1)]
        return jnp.stack(outs, axis=-1)      # (B, O, L)

    def bn(x, g, bta, m, v):
        return ((x - m[None, :, None]) / jnp.sqrt(v[None, :, None] + eps)
                * g[None, :, None] + bta[None, :, None])

    h = jax.nn.relu(bn(conv1d(x_ncl, params["conv1_w"], params["conv1_b"]),
                       params["bn1_gamma"], params["bn1_beta"],
                       params["bn1_mean"], params["bn1_var"]))
    g = jax.nn.relu(bn(conv1d(h, params["conv2_w"], params["conv2_b"]),
                       params["bn2_gamma"], params["bn2_beta"],
                       params["bn2_mean"], params["bn2_var"]))
    flat = g.reshape(g.shape[0], -1)
    lin = flat @ params["fc_w"].T + params["fc_b"]
    return jax.nn.softplus(lin) + 1e-6


def init_params(key, input_channels=4, time_steps=3, num_filters=32):
    Cin, T, F1 = input_channels, time_steps, num_filters
    F2 = 2 * F1
    L2 = T - 2
    ks = jax.random.split(key, 16)
    n = lambda k, shp, s=0.1: s * jax.random.normal(k, shp, jnp.float32)
    return {
        "conv1_w": n(ks[0], (F1, Cin, 2)),
        "conv1_b": n(ks[1], (F1,)),
        "bn1_gamma": 1.0 + n(ks[2], (F1,)),
        "bn1_beta": n(ks[3], (F1,)),
        "bn1_mean": n(ks[4], (F1,)),
        "bn1_var": jnp.abs(jax.random.normal(ks[5], (F1,), jnp.float32)) + 0.5,
        "conv2_w": n(ks[6], (F2, F1, 2)),
        "conv2_b": n(ks[7], (F2,)),
        "bn2_gamma": 1.0 + n(ks[8], (F2,)),
        "bn2_beta": n(ks[9], (F2,)),
        "bn2_mean": n(ks[10], (F2,)),
        "bn2_var": jnp.abs(jax.random.normal(ks[11], (F2,), jnp.float32)) + 0.5,
        "fc_w": n(ks[12], (1, F2 * L2)),
        "fc_b": n(ks[13], (1,)),
    }


if __name__ == "__main__":
    B, Cin, T = 64, 4, 3
    key = jax.random.PRNGKey(0)
    pkey, xkey = jax.random.split(key)
    params = init_params(pkey, input_channels=Cin, time_steps=T, num_filters=32)
    x = jax.random.normal(xkey, (B, Cin, T), jnp.float32)   # PyTorch NCL layout

    # block_b=32 exercises the batch grid (2 tiles); default 512 for larger B.
    out = variance_model_forward(x, params, block_b=32)
    out = jax.block_until_ready(out)

    ref = reference_forward(x, params)
    assert out.shape == (B, 1)
    assert jnp.allclose(out, ref, atol=1e-5, rtol=1e-5), (out, ref)
    print("KERNEL_OK")
</pallas_src>

<mosaic_0001>
module attributes {stable_mosaic.version = 11 : i64} {
  func.func @variance_kernel(%arg0: i32, %arg1: memref<32x16xf32, #tpu.memory_space<vmem>>, %arg2: memref<16x64xf32, #tpu.memory_space<vmem>>, %arg3: memref<1x64xf32, #tpu.memory_space<vmem>>, %arg4: memref<64x64xf32, #tpu.memory_space<vmem>>, %arg5: memref<1x64xf32, #tpu.memory_space<vmem>>, %arg6: memref<64x1xf32, #tpu.memory_space<vmem>>, %arg7: memref<1x1xf32, #tpu.memory_space<vmem>>, %arg8: memref<32x1xf32, #tpu.memory_space<vmem>>) attributes {dimension_semantics = [#tpu.dimension_semantics<parallel>], iteration_bounds = array<i64: 2>, scalar_prefetch = 0 : i64, scratch_operands = 0 : i64, tpu.core_type = #tpu.core_type<tc>, window_params = [{transform_indices = @transform_0, window_bounds = array<i64: 32, 16>}, {pipeline_mode = #tpu.pipeline_mode<synchronous>, transform_indices = @transform_1, window_bounds = array<i64: 16, 64>}, {pipeline_mode = #tpu.pipeline_mode<synchronous>, transform_indices = @transform_2, window_bounds = array<i64: 1, 64>}, {pipeline_mode = #tpu.pipeline_mode<synchronous>, transform_indices = @transform_3, window_bounds = array<i64: 64, 64>}, {pipeline_mode = #tpu.pipeline_mode<synchronous>, transform_indices = @transform_4, window_bounds = array<i64: 1, 64>}, {pipeline_mode = #tpu.pipeline_mode<synchronous>, transform_indices = @transform_5, window_bounds = array<i64: 64, 1>}, {pipeline_mode = #tpu.pipeline_mode<synchronous>, transform_indices = @transform_6, window_bounds = array<i64: 1, 1>}, {transform_indices = @transform_7, window_bounds = array<i64: 32, 1>}]} {
    %c0 = arith.constant 0 : index
    %c0_0 = arith.constant 0 : index
    %0 = vector.load %arg1[%c0, %c0_0] : memref<32x16xf32, #tpu.memory_space<vmem>>, vector<32x16xf32>
    %c0_1 = arith.constant 0 : index
    %c0_2 = arith.constant 0 : index
    %1 = vector.load %arg2[%c0_1, %c0_2] : memref<16x64xf32, #tpu.memory_space<vmem>>, vector<16x64xf32>
    %cst = arith.constant dense<0.000000e+00> : vector<32x64xf32>
    %2 = tpu.matmul %0, %1, %cst {dimension_numbers = #tpu.dot_dimension_numbers<[1], [0], [0], [1], [0, 0, 1, 1], [], []>} : vector<32x16xf32>, vector<16x64xf32>, vector<32x64xf32> -> vector<32x64xf32>
    %c0_3 = arith.constant 0 : index
    %c0_4 = arith.constant 0 : index
    %3 = vector.load %arg3[%c0_3, %c0_4] : memref<1x64xf32, #tpu.memory_space<vmem>>, vector<1x64xf32>
    %4 = vector.broadcast %3 : vector<1x64xf32> to vector<32x64xf32>
    %5 = arith.addf %2, %4 : vector<32x64xf32>
    %cst_5 = arith.constant 0.000000e+00 : f32
    %6 = vector.broadcast %cst_5 : f32 to vector<32x64xf32>
    %7 = arith.maximumf %5, %6 : vector<32x64xf32>
    %c0_6 = arith.constant 0 : index
    %c0_7 = arith.constant 0 : index
    %8 = vector.load %arg4[%c0_6, %c0_7] : memref<64x64xf32, #tpu.memory_space<vmem>>, vector<64x64xf32>
    %cst_8 = arith.constant dense<0.000000e+00> : vector<32x64xf32>
    %9 = tpu.matmul %7, %8, %cst_8 {dimension_numbers = #tpu.dot_dimension_numbers<[1], [0], [0], [1], [0, 0, 1, 1], [], []>} : vector<32x64xf32>, vector<64x64xf32>, vector<32x64xf32> -> vector<32x64xf32>
    %c0_9 = arith.constant 0 : index
    %c0_10 = arith.constant 0 : index
    %10 = vector.load %arg5[%c0_9, %c0_10] : memref<1x64xf32, #tpu.memory_space<vmem>>, vector<1x64xf32>
    %11 = vector.broadcast %10 : vector<1x64xf32> to vector<32x64xf32>
    %12 = arith.addf %9, %11 : vector<32x64xf32>
    %cst_11 = arith.constant 0.000000e+00 : f32
    %13 = vector.broadcast %cst_11 : f32 to vector<32x64xf32>
    %14 = arith.maximumf %12, %13 : vector<32x64xf32>
    %c0_12 = arith.constant 0 : index
    %c0_13 = arith.constant 0 : index
    %15 = vector.load %arg6[%c0_12, %c0_13] : memref<64x1xf32, #tpu.memory_space<vmem>>, vector<64x1xf32>
    %cst_14 = arith.constant dense<0.000000e+00> : vector<32x1xf32>
    %16 = tpu.matmul %14, %15, %cst_14 {dimension_numbers = #tpu.dot_dimension_numbers<[1], [0], [0], [1], [0, 0, 1, 1], [], []>} : vector<32x64xf32>, vector<64x1xf32>, vector<32x1xf32> -> vector<32x1xf32>
    %c0_15 = arith.constant 0 : index
    %c0_16 = arith.constant 0 : index
    %17 = vector.load %arg7[%c0_15, %c0_16] : memref<1x1xf32, #tpu.memory_space<vmem>>, vector<1x1xf32>
    %18 = vector.broadcast %17 : vector<1x1xf32> to vector<32x1xf32>
    %19 = arith.addf %16, %18 : vector<32x1xf32>
    %cst_17 = arith.constant 0.000000e+00 : f32
    %20 = vector.broadcast %cst_17 : f32 to vector<32x1xf32>
    %21 = arith.maximumf %19, %20 : vector<32x1xf32>
    %22 = vector.broadcast %cst_17 : f32 to vector<32x1xf32>
    %23 = arith.subf %19, %22 : vector<32x1xf32>
    %24 = arith.cmpf one, %23, %23 : vector<32x1xf32>
    %25 = vector.broadcast %cst_17 : f32 to vector<32x1xf32>
    %26 = arith.addf %19, %25 : vector<32x1xf32>
    %27 = math.absf %23 : vector<32x1xf32>
    %cst_18 = arith.constant 0.000000e+00 : f32
    %28 = vector.broadcast %cst_18 : f32 to vector<32x1xf32>
    %29 = arith.subf %28, %27 : vector<32x1xf32>
    %30 = math.exp %29 : vector<32x1xf32>
    %31 = math.log1p %30 : vector<32x1xf32>
    %32 = arith.addf %21, %31 : vector<32x1xf32>
    %33 = arith.select %24, %26, %32 : vector<32x1xi1>, vector<32x1xf32>
    %cst_19 = arith.constant 9.99999997E-7 : f32
    %34 = vector.broadcast %cst_19 : f32 to vector<32x1xf32>
    %35 = arith.addf %33, %34 : vector<32x1xf32>
    %c0_20 = arith.constant 0 : index
    %c0_21 = arith.constant 0 : index
    %36 = vector.load %arg8[%c0_20, %c0_21] : memref<32x1xf32, #tpu.memory_space<vmem>>, vector<32x1xf32>
    tpu.vector_store %arg8[%c0_20, %c0_21], %35 {strides = array<i32>} : memref<32x1xf32, #tpu.memory_space<vmem>>, vector<32x1xf32>,
    return
  }
  func.func @transform_0(%arg0: i32) -> (i32, i32) {
    %c0_i32 = arith.constant 0 : i32
    %c0_i32_0 = arith.constant 0 : i32
    return %arg0, %c0_i32 : i32, i32
  }
  func.func @transform_1(%arg0: i32) -> (i32, i32) {
    %c0_i32 = arith.constant 0 : i32
    %c0_i32_0 = arith.constant 0 : i32
    %c0_i32_1 = arith.constant 0 : i32
    return %c0_i32, %c0_i32_0 : i32, i32
  }
  func.func @transform_2(%arg0: i32) -> (i32, i32) {
    %c0_i32 = arith.constant 0 : i32
    %c0_i32_0 = arith.constant 0 : i32
    %c0_i32_1 = arith.constant 0 : i32
    return %c0_i32, %c0_i32_0 : i32, i32
  }
  func.func @transform_3(%arg0: i32) -> (i32, i32) {
    %c0_i32 = arith.constant 0 : i32
    %c0_i32_0 = arith.constant 0 : i32
    %c0_i32_1 = arith.constant 0 : i32
    return %c0_i32, %c0_i32_0 : i32, i32
  }
  func.func @transform_4(%arg0: i32) -> (i32, i32) {
    %c0_i32 = arith.constant 0 : i32
    %c0_i32_0 = arith.constant 0 : i32
    %c0_i32_1 = arith.constant 0 : i32
    return %c0_i32, %c0_i32_0 : i32, i32
  }
  func.func @transform_5(%arg0: i32) -> (i32, i32) {
    %c0_i32 = arith.constant 0 : i32
    %c0_i32_0 = arith.constant 0 : i32
    %c0_i32_1 = arith.constant 0 : i32
    return %c0_i32, %c0_i32_0 : i32, i32
  }
  func.func @transform_6(%arg0: i32) -> (i32, i32) {
    %c0_i32 = arith.constant 0 : i32
    %c0_i32_0 = arith.constant 0 : i32
    %c0_i32_1 = arith.constant 0 : i32
    return %c0_i32, %c0_i32_0 : i32, i32
  }
  func.func @transform_7(%arg0: i32) -> (i32, i32) {
    %c0_i32 = arith.constant 0 : i32
    %c0_i32_0 = arith.constant 0 : i32
    return %arg0, %c0_i32 : i32, i32
  }
}

</mosaic_0001>

<llo_original>
// kernel: tpu_custom_call.1
$region0: #{tpu_custom_call.1}
  #allocation0 [shape = 'u32[]', space=smem, size = 0x4, offset = 0x4, fixed_abs, tag = 'smem constant byte address 0x4 - core index']
  #allocation1 [shape = 'u32[144,128]{1,0:T(1,128)}', space=vmem, size = 0x12000, scoped, tag = 'internal scratch']
  #allocation2 [shape = 'f32[1,1]{1,0:T(1,128)S(1)}', space=vmem, size = 0x200, scoped, tag = 'scoped memory for tpu_custom_call.1']
  %s0 = inlined_call_operand.vmem [shape: f32[64,16], index: 0, kind: input, shape index: {}]
  %s1 = inlined_call_operand.vmem [shape: f32[16,64], index: 1, kind: input, shape index: {}]
  %s2 = inlined_call_operand.vmem [shape: f32[1,64], index: 2, kind: input, shape index: {}]
  %s3 = inlined_call_operand.vmem [shape: f32[64,64], index: 3, kind: input, shape index: {}]
  %s4 = inlined_call_operand.vmem [shape: f32[1,64], index: 4, kind: input, shape index: {}]
  %s5 = inlined_call_operand.vmem [shape: f32[64,1], index: 5, kind: input, shape index: {}]
  %s6 = inlined_call_operand.<no memory space> [shape: f32[1,1], index: 6, kind: input, shape index: {}]
  %s7 = inlined_call_operand.vmem [shape: f32[64,1], index: 7, kind: output, shape index: {}]
  %s8 = sld [smem:[#allocation0]]
  $region61: #{tpu_custom_call.1} parent=0
    _
  %s10 = ssub.s32 1, %s8
  %s11 = scalar_select 0, %s10, %s8
  %v12 = vstv %s6
  %13 = vst [vmem:[#allocation2] sm:$0x1] %v12
  loop: start=0, step=1, limit=4
  $region2: #{tpu_custom_call.1} parent=0 // loop_pre_header
    _
  $region3: #{tpu_custom_call.1} parent=0 // loop_header
    %s15 = sphi 0, %s19
    %p16 = scmp.ge.s32.totalorder %s15, 4
    %s25 = sphi 0, %s27
    %s28 = sphi 0, %s25
    %s29 = sphi 0, %s28
    %s45 = sphi 0, %s29
    %s49 = sphi 0, %s49
    %s51 = sphi 0, %s49
    %s52 = sphi 0, %s51
    %s66 = sphi 0, %s52
    %s70 = sphi 0, %s70
    %s72 = sphi 0, %s70
    %s73 = sphi 0, %s72
    %s87 = sphi 0, %s73
    %s91 = sphi 0, %s91
    %s93 = sphi 0, %s91
    %s94 = sphi 0, %s93
    %s108 = sphi 0, %s94
    %s112 = sphi 0, %s112
    %s114 = sphi 0, %s112
    %s115 = sphi 0, %s114
    %s129 = sphi 0, %s115
    %s133 = sphi 0, %s133
    %s135 = sphi 0, %s133
    %s136 = sphi 0, %s135
    %s150 = sphi 0, %s136
    %s154 = sphi 0, %s154
    %s156 = sphi 0, %s154
    %s157 = sphi 0, %s156
    %s171 = sphi 0, %s157
    %s177 = sphi 0, %s179
    %s180 = sphi 0, %s177
    %s181 = sphi 0, %s180
    %s197 = sphi 0, %s181
  $region4: #{tpu_custom_call.1} parent=0 // loop_header_branch
    %18 = sbr.rel (%p16) target = $region8
  $region5: #{tpu_custom_call.1} parent=0 // loop_body
    %s20 = ssub.s32 %s15, 1
    %s21 = ssub.s32 %s15, 2
    %s22 = sadd.s32 %s15, 1
    %s23 = ssub.s32 %s15, %s22
    %p24 = scmp.eq.s32.totalorder %s23, 0
    %s26 = sadd.s32 %s25, 1
    %s27 = scalar_select %p24, %s25, %s26
    %p30 = pneg %p24
    %p31 = scmp.eq.s32.totalorder %s15, 1
    %p32 = por %p30, %p31
    %p33 = scmp.ne.s32.totalorder %s25, %s28
    %p34 = scmp.eq.s32.totalorder %s15, 0
    %p35 = por %p33, %p34
    %p36 = scmp.ne.s32.totalorder %s25, %s28
    %p37 = scmp.eq.s32.totalorder %s20, 1
    %p38 = por %p36, %p37
    %p39 = scmp.ne.s32.totalorder %s28, %s29
    %p40 = scmp.eq.s32.totalorder %s20, 0
    %p41 = por %p39, %p40
    %p42 = scmp.ne.s32.totalorder %s28, %s29
    %p43 = scmp.eq.s32.totalorder %s21, 1
    %p44 = por %p42, %p43
    %p46 = scmp.ne.s32.totalorder %s29, %s45
    %p47 = scmp.eq.s32.totalorder %s21, 0
    %p48 = por %p46, %p47
    %s50 = sadd.s32 %s49, 1
    %p53 = scmp.eq.s32.totalorder %s15, 1
    %p54 = scmp.ne.s32.totalorder %s49, %s51
    %p55 = scmp.eq.s32.totalorder %s15, 0
    %p56 = por %p54, %p55
    %p57 = scmp.ne.s32.totalorder %s49, %s51
    %p58 = scmp.eq.s32.totalorder %s20, 1
    %p59 = por %p57, %p58
    %p60 = scmp.ne.s32.totalorder %s51, %s52
    %p61 = scmp.eq.s32.totalorder %s20, 0
    %p62 = por %p60, %p61
    %p63 = scmp.ne.s32.totalorder %s51, %s52
    %p64 = scmp.eq.s32.totalorder %s21, 1
    %p65 = por %p63, %p64
    %p67 = scmp.ne.s32.totalorder %s52, %s66
    %p68 = scmp.eq.s32.totalorder %s21, 0
    %p69 = por %p67, %p68
    %s71 = sadd.s32 %s70, 1
    %p74 = scmp.eq.s32.totalorder %s15, 1
    %p75 = scmp.ne.s32.totalorder %s70, %s72
    %p76 = scmp.eq.s32.totalorder %s15, 0
    %p77 = por %p75, %p76
    %p78 = scmp.ne.s32.totalorder %s70, %s72
    %p79 = scmp.eq.s32.totalorder %s20, 1
    %p80 = por %p78, %p79
    %p81 = scmp.ne.s32.totalorder %s72, %s73
    %p82 = scmp.eq.s32.totalorder %s20, 0
    %p83 = por %p81, %p82
    %p84 = scmp.ne.s32.totalorder %s72, %s73
    %p85 = scmp.eq.s32.totalorder %s21, 1
    %p86 = por %p84, %p85
    %p88 = scmp.ne.s32.totalorder %s73, %s87
    %p89 = scmp.eq.s32.totalorder %s21, 0
    %p90 = por %p88, %p89
    %s92 = sadd.s32 %s91, 1
    %p95 = scmp.eq.s32.totalorder %s15, 1
    %p96 = scmp.ne.s32.totalorder %s91, %s93
    %p97 = scmp.eq.s32.totalorder %s15, 0
    %p98 = por %p96, %p97
    %p99 = scmp.ne.s32.totalorder %s91, %s93
    %p100 = scmp.eq.s32.totalorder %s20, 1
    %p101 = por %p99, %p100
    %p102 = scmp.ne.s32.totalorder %s93, %s94
    %p103 = scmp.eq.s32.totalorder %s20, 0
    %p104 = por %p102, %p103
    %p105 = scmp.ne.s32.totalorder %s93, %s94
    %p106 = scmp.eq.s32.totalorder %s21, 1
    %p107 = por %p105, %p106
    %p109 = scmp.ne.s32.totalorder %s94, %s108
    %p110 = scmp.eq.s32.totalorder %s21, 0
    %p111 = por %p109, %p110
    %s113 = sadd.s32 %s112, 1
    %p116 = scmp.eq.s32.totalorder %s15, 1
    %p117 = scmp.ne.s32.totalorder %s112, %s114
    %p118 = scmp.eq.s32.totalorder %s15, 0
    %p119 = por %p117, %p118
    %p120 = scmp.ne.s32.totalorder %s112, %s114
    %p121 = scmp.eq.s32.totalorder %s20, 1
    %p122 = por %p120, %p121
    %p123 = scmp.ne.s32.totalorder %s114, %s115
    %p124 = scmp.eq.s32.totalorder %s20, 0
    %p125 = por %p123, %p124
    %p126 = scmp.ne.s32.totalorder %s114, %s115
    %p127 = scmp.eq.s32.totalorder %s21, 1
    %p128 = por %p126, %p127
    %p130 = scmp.ne.s32.totalorder %s115, %s129
    %p131 = scmp.eq.s32.totalorder %s21, 0
    %p132 = por %p130, %p131
    %s134 = sadd.s32 %s133, 1
    %p137 = scmp.eq.s32.totalorder %s15, 1
    %p138 = scmp.ne.s32.totalorder %s133, %s135
    %p139 = scmp.eq.s32.totalorder %s15, 0
    %p140 = por %p138, %p139
    %p141 = scmp.ne.s32.totalorder %s133, %s135
    %p142 = scmp.eq.s32.totalorder %s20, 1
    %p143 = por %p141, %p142
    %p144 = scmp.ne.s32.totalorder %s135, %s136
    %p145 = scmp.eq.s32.totalorder %s20, 0
    %p146 = por %p144, %p145
    %p147 = scmp.ne.s32.totalorder %s135, %s136
    %p148 = scmp.eq.s32.totalorder %s21, 1
    %p149 = por %p147, %p148
    %p151 = scmp.ne.s32.totalorder %s136, %s150
    %p152 = scmp.eq.s32.totalorder %s21, 0
    %p153 = por %p151, %p152
    %s155 = sadd.s32 %s154, 1
    %p158 = scmp.eq.s32.totalorder %s15, 1
    %p159 = scmp.ne.s32.totalorder %s154, %s156
    %p160 = scmp.eq.s32.totalorder %s15, 0
    %p161 = por %p159, %p160
    %p162 = scmp.ne.s32.totalorder %s154, %s156
    %p163 = scmp.eq.s32.totalorder %s20, 1
    %p164 = por %p162, %p163
    %p165 = scmp.ne.s32.totalorder %s156, %s157
    %p166 = scmp.eq.s32.totalorder %s20, 0
    %p167 = por %p165, %p166
    %p168 = scmp.ne.s32.totalorder %s156, %s157
    %p169 = scmp.eq.s32.totalorder %s21, 1
    %p170 = por %p168, %p169
    %p172 = scmp.ne.s32.totalorder %s157, %s171
    %p173 = scmp.eq.s32.totalorder %s21, 0
    %p174 = por %p172, %p173
    %s175 = ssub.s32 %s15, %s22
    %p176 = scmp.eq.s32.totalorder %s175, 0
    %s178 = sadd.s32 %s177, 1
    %s179 = scalar_select %p176, %s177, %s178
    %p182 = pneg %p176
    %p183 = scmp.eq.s32.totalorder %s15, 1
    %p184 = por %p182, %p183
    %p185 = scmp.ne.s32.totalorder %s177, %s180
    %p186 = scmp.eq.s32.totalorder %s15, 0
    %p187 = por %p185, %p186
    %p188 = scmp.ne.s32.totalorder %s177, %s180
    %p189 = scmp.eq.s32.totalorder %s20, 1
    %p190 = por %p188, %p189
    %p191 = scmp.ne.s32.totalorder %s180, %s181
    %p192 = scmp.eq.s32.totalorder %s20, 0
    %p193 = por %p191, %p192
    %p194 = scmp.ne.s32.totalorder %s180, %s181
    %p195 = scmp.eq.s32.totalorder %s21, 1
    %p196 = por %p194, %p195
    %p198 = scmp.ne.s32.totalorder %s181, %s197
    %p199 = scmp.eq.s32.totalorder %s21, 0
    %p200 = por %p198, %p199
    %p201 = scmp.le.s32.totalorder 1, %s15
    %p202 = scmp.lt.s32.totalorder %s15, 3
    %p203 = pnand %p201, %p202
    %p204 = pneg %p203
    // Predicated region
    $region9: #{tpu_custom_call.1} parent=5 // pred_check
      _
    $region10: #{tpu_custom_call.1} parent=5 // pred_check_branch
      %206 = sbr.rel (%p203) target = $region12
    $region11: #{tpu_custom_call.1} parent=5 // pred_region
      %s207 = ssub.s32 %s15, 1
      // Predicated region
      $region13: #{tpu_custom_call.1} parent=11 // pred_check
        %p208 = pneg %p62
      $region14: #{tpu_custom_call.1} parent=11 // pred_check_branch
        %210 = sbr.rel (%p208) target = $region16
      $region15: #{tpu_custom_call.1} parent=11 // pred_region
        _
      $region16: #{tpu_custom_call.1} parent=11 // pred_fallthru
        _
      // Predicated region
      $region17: #{tpu_custom_call.1} parent=11 // pred_check
        %p211 = pneg %p83
      $region18: #{tpu_custom_call.1} parent=11 // pred_check_branch
        %213 = sbr.rel (%p211) target = $region20
      $region19: #{tpu_custom_call.1} parent=11 // pred_region
        _
      $region20: #{tpu_custom_call.1} parent=11 // pred_fallthru
        _
      // Predicated region
      $region21: #{tpu_custom_call.1} parent=11 // pred_check
        %p214 = pneg %p104
      $region22: #{tpu_custom_call.1} parent=11 // pred_check_branch
        %216 = sbr.rel (%p214) target = $region24
      $region23: #{tpu_custom_call.1} parent=11 // pred_region
        _
      $region24: #{tpu_custom_call.1} parent=11 // pred_fallthru
        _
      // Predicated region
      $region25: #{tpu_custom_call.1} parent=11 // pred_check
        %p217 = pneg %p125
      $region26: #{tpu_custom_call.1} parent=11 // pred_check_branch
        %219 = sbr.rel (%p217) target = $region28
      $region27: #{tpu_custom_call.1} parent=11 // pred_region
        _
      $region28: #{tpu_custom_call.1} parent=11 // pred_fallthru
        _
      // Predicated region
      $region29: #{tpu_custom_call.1} parent=11 // pred_check
        %p220 = pneg %p146
      $region30: #{tpu_custom_call.1} parent=11 // pred_check_branch
        %222 = sbr.rel (%p220) target = $region32
      $region31: #{tpu_custom_call.1} parent=11 // pred_region
        _
      $region32: #{tpu_custom_call.1} parent=11 // pred_fallthru
        _
      // Predicated region
      $region33: #{tpu_custom_call.1} parent=11 // pred_check
        %p223 = pneg %p167
      $region34: #{tpu_custom_call.1} parent=11 // pred_check_branch
        %225 = sbr.rel (%p223) target = $region36
      $region35: #{tpu_custom_call.1} parent=11 // pred_region
        _
      $region36: #{tpu_custom_call.1} parent=11 // pred_fallthru
        _
    $region12: #{tpu_custom_call.1} parent=5 // pred_fallthru
      _
    %p226 = scmp.lt.s32.totalorder %s15, 2
    // Predicated region
    $region37: #{tpu_custom_call.1} parent=5 // pred_check
      %p227 = pneg %p226
    $region38: #{tpu_custom_call.1} parent=5 // pred_check_branch
      %229 = sbr.rel (%p227) target = $region40
    $region39: #{tpu_custom_call.1} parent=5 // pred_region
      // Predicated region
      $region41: #{tpu_custom_call.1} parent=39 // pred_check
        %p230 = pneg %p35
      $region42: #{tpu_custom_call.1} parent=39 // pred_check_branch
        %232 = sbr.rel (%p230) target = $region44
      $region43: #{tpu_custom_call.1} parent=39 // pred_region
        %s233 = smul.u32 4, %s15
        %p234 = scmp.lt.s32.totalorder %s233, 7
        %s235 = scalar_select %p234, %s233, 7
        %s236 = smul.addr %s235, 8
        %s237 = scalar_lea.vmem %s0, %s236
        %s238 = smul.u32 4, %s15
      $region44: #{tpu_custom_call.1} parent=39 // pred_fallthru
        _
    $region40: #{tpu_custom_call.1} parent=5 // pred_fallthru
      _
    %p239 = scmp.le.s32.totalorder 1, %s15
    %p240 = scmp.lt.s32.totalorder %s15, 3
    %p241 = pnand %p239, %p240
    %p242 = pneg %p241
    // Predicated region
    $region45: #{tpu_custom_call.1} parent=5 // pred_check
      _
    $region46: #{tpu_custom_call.1} parent=5 // pred_check_branch
      %244 = sbr.rel (%p241) target = $region48
    $region47: #{tpu_custom_call.1} parent=5 // pred_region
      %s245 = ssub.s32 %s15, 1
      %s246 = smul.u32 4, %s20
      %p247 = scmp.lt.s32.totalorder %s246, 7
      %s248 = scalar_select %p247, %s246, 7
      %s249 = smul.addr %s248, 8
      %s250 = scalar_lea.vmem %s0, %s249
      %p251 = pneg %p41
      %p252 = pneg %p38
      %p253 = pneg %p62
      %p254 = pneg %p59
      %p255 = pneg %p83
      %p256 = pneg %p80
      %p257 = pneg %p104
      %p258 = pneg %p101
      %p259 = pneg %p125
      %p260 = pneg %p122
      %p261 = pneg %p146
      %p262 = pneg %p143
      %p263 = pneg %p167
      %p264 = pneg %p164
      %p265 = pneg %p193
      %p266 = pneg %p190
      %s267 = smul.u32 4, %s20
      %p268 = scmp.lt.s32.totalorder %s267, 7
      %s269 = scalar_select %p268, %s267, 7
      %s270 = smul.addr %s269, 8
      %s271 = scalar_lea.vmem %s7, %s270
      %s272 = smul.u32 4, %s20
      %p273 = scmp.lt.s32.totalorder %s272, 7
      %s274 = scalar_select %p273, %s272, 7
      %s275 = smul.addr %s274, 8
      %s276 = scalar_lea.vmem %s0, %s275
      %s277 = smul.u32 4, %s20
      %s278 = smul.u32 4, %s20
      %p279 = scmp.lt.s32.totalorder %s278, 7
      %s280 = scalar_select %p279, %s278, 7
      %s281 = smul.addr %s280, 8
      %s282 = scalar_lea.vmem %s7, %s281
      %s283 = smul.u32 4, %s20
      %v284 = vld [vmem:[%s276] sm:$0xff]
      %v285 = vld [vmem:[%s276 + $0x8] sm:$0xff]
      %v286 = vld [vmem:[%s276 + $0x10] sm:$0xff]
      %v287 = vld [vmem:[%s276 + $0x18] sm:$0xff]
      %v288 = vld [vmem:[%s1] sm:$0xff]
      %v289 = vld [vmem:[%s1 + $0x8] sm:$0xff]
      %v290 = vld [vmem:[%s2] sm:$0x1]
      %v292 = vlaneseq
      %v293 = vshrl.u32 %v292, 7
      %v294 = vsub.s32 0, %v293
      %v295 = vrot.slane %v290, %v294
      %vm297 = vcmask 130048
      %v299 = vsel %vm297, %v284, 0
      %v302 = vsel %vm297, %v285, 0
      %v305 = vsel %vm297, %v286, 0
      %v308 = vsel %vm297, %v287, 0
      %310 = vmatprep.subr.mxu0 0.0
      %311 = vmatpush1.msra.mxu0 0.0
      %312 = vmatprep.subr.mxu0 0.0
      %313 = vmatpush1.msra.mxu0 0.0
      %314 = vmatprep.subr.mxu0 0.0
      %315 = vmatpush1.msra.mxu0 0.0
      %316 = vmatprep.subr.mxu0 0.0
      %317 = vmatpush1.msra.mxu0 0.0
      %318 = vmatprep.subr.mxu0 0.0
      %319 = vmatpush1.msra.mxu0 0.0
      %320 = vmatprep.subr.mxu0 0.0
      %321 = vmatpush1.msra.mxu0 0.0
      %322 = vmatprep.subr.mxu0 0.0
      %323 = vmatpush1.msra.mxu0 0.0
      %324 = vmatprep.subr.mxu0 0.0
      %325 = vmatpush1.msra.mxu0 0.0
      %326 = vmatprep.subr.mxu0 0.0
      %327 = vmatpush1.msra.mxu0 0.0
      %328 = vmatprep.subr.mxu0 0.0
      %329 = vmatpush1.msra.mxu0 0.0
      %330 = vmatprep.subr.mxu0 0.0
      %331 = vmatpush1.msra.mxu0 0.0
      %332 = vmatprep.subr.mxu0 0.0
      %333 = vmatpush1.msra.mxu0 0.0
      %334 = vmatprep.subr.mxu0 0.0
      %335 = vmatpush1.msra.mxu0 0.0
      %336 = vmatprep.subr.mxu0 0.0
      %337 = vmatpush1.msra.mxu0 0.0
      %338 = vmatprep.subr.mxu0 0.0
      %339 = vmatpush1.msra.mxu0 %v289
      %340 = vmatprep.subr.mxu0 0.0
      %341 = vmatpush1.msra.mxu0 %v288
      %342 = vmatprep.subr.mxu0 0.0
      %343 = vmatpush2.msra.mxu0 0.0
      %344 = vmatprep.subr.mxu0 0.0
      %345 = vmatpush2.msra.mxu0 0.0
      %346 = vmatprep.subr.mxu0 0.0
      %347 = vmatpush2.msra.mxu0 0.0
      %348 = vmatprep.subr.mxu0 0.0
      %349 = vmatpush2.msra.mxu0 0.0
      %350 = vmatprep.subr.mxu0 0.0
      %351 = vmatpush2.msra.mxu0 0.0
      %352 = vmatprep.subr.mxu0 0.0
      %353 = vmatpush2.msra.mxu0 0.0
      %354 = vmatprep.subr.mxu0 0.0
      %355 = vmatpush2.msra.mxu0 0.0
      %356 = vmatprep.subr.mxu0 0.0
      %357 = vmatpush2.msra.mxu0 0.0
      %358 = vmatprep.subr.mxu0 0.0
      %359 = vmatpush2.msra.mxu0 0.0
      %360 = vmatprep.subr.mxu0 0.0
      %361 = vmatpush2.msra.mxu0 0.0
      %362 = vmatprep.subr.mxu0 0.0
      %363 = vmatpush2.msra.mxu0 0.0
      %364 = vmatprep.subr.mxu0 0.0
      %365 = vmatpush2.msra.mxu0 0.0
      %366 = vmatprep.subr.mxu0 0.0
      %367 = vmatpush2.msra.mxu0 0.0
      %368 = vmatprep.subr.mxu0 0.0
      %369 = vmatpush2.msra.mxu0 0.0
      %370 = vmatprep.subr.mxu0 0.0
      %371 = vmatpush2.msra.mxu0 0.0
      %372 = vmatprep.subr.mxu0 0.0
      %373 = vmatpush2.msra.mxu0 0.0
      %374 = vmatprep.mubr.f32.mxu0 0.0
      %375 = vmatmul.mubr.f32.gmra.mxu0 %v299
      %v376 = vpop.f32.mrf.mxu0
      %v377 = vadd.f32 %v295, %v376
      %v378 = vpop.f32.mrf.mxu0
      %379 = vmatprep.mubr.f32.mxu0 0.0
      %380 = vmatmul.mubr.f32.gmra.mxu0 %v302
      %v381 = vpop.f32.mrf.mxu0
      %v382 = vadd.f32 %v295, %v381
      %v383 = vpop.f32.mrf.mxu0
      %384 = vmatprep.mubr.f32.mxu0 0.0
      %385 = vmatmul.mubr.f32.gmra.mxu0 %v305
      %v386 = vpop.f32.mrf.mxu0
      %v387 = vadd.f32 %v295, %v386
      %v388 = vpop.f32.mrf.mxu0
      %389 = vmatprep.mubr.f32.mxu0 0.0
      %390 = vmatmul.mubr.f32.gmra.mxu0 %v308
      %v391 = vpop.f32.mrf.mxu0
      %v392 = vadd.f32 %v295, %v391
      %v393 = vpop.f32.mrf.mxu0
      %394 = vdwg.mxu0
      %v395 = vmax.f32 %v377, 0.0
      %v396 = vmax.f32 %v382, 0.0
      %v397 = vmax.f32 %v387, 0.0
      %v398 = vmax.f32 %v392, 0.0
      %v399 = vld [vmem:[%s3] sm:$0xff]
      %v400 = vld [vmem:[%s3 + $0x8] sm:$0xff]
      %v401 = vld [vmem:[%s3 + $0x10] sm:$0xff]
      %v402 = vld [vmem:[%s3 + $0x18] sm:$0xff]
      %v403 = vld [vmem:[%s3 + $0x20] sm:$0xff]
      %v404 = vld [vmem:[%s3 + $0x28] sm:$0xff]
      %v405 = vld [vmem:[%s3 + $0x30] sm:$0xff]
      %v406 = vld [vmem:[%s3 + $0x38] sm:$0xff]
      %v407 = vld [vmem:[%s4] sm:$0x1]
      %v409 = vlaneseq
      %v410 = vshrl.u32 %v409, 7
      %v411 = vsub.s32 0, %v410
      %v412 = vrot.slane %v407, %v411
      %vm414 = vcmask 523264
      %v416 = vsel %vm414, %v395, 0
      %v419 = vsel %vm414, %v396, 0
      %v422 = vsel %vm414, %v397, 0
      %v425 = vsel %vm414, %v398, 0
      %427 = vmatprep.subr.mxu0 0.0
      %428 = vmatpush1.msra.mxu0 0.0
      %429 = vmatprep.subr.mxu0 0.0
      %430 = vmatpush1.msra.mxu0 0.0
      %431 = vmatprep.subr.mxu0 0.0
      %432 = vmatpush1.msra.mxu0 0.0
      %433 = vmatprep.subr.mxu0 0.0
      %434 = vmatpush1.msra.mxu0 0.0
      %435 = vmatprep.subr.mxu0 0.0
      %436 = vmatpush1.msra.mxu0 0.0
      %437 = vmatprep.subr.mxu0 0.0
      %438 = vmatpush1.msra.mxu0 0.0
      %439 = vmatprep.subr.mxu0 0.0
      %440 = vmatpush1.msra.mxu0 0.0
      %441 = vmatprep.subr.mxu0 0.0
      %442 = vmatpush1.msra.mxu0 0.0
      %443 = vmatprep.subr.mxu0 0.0
      %444 = vmatpush1.msra.mxu0 %v406
      %445 = vmatprep.subr.mxu0 0.0
      %446 = vmatpush1.msra.mxu0 %v405
      %447 = vmatprep.subr.mxu0 0.0
      %448 = vmatpush1.msra.mxu0 %v404
      %449 = vmatprep.subr.mxu0 0.0
      %450 = vmatpush1.msra.mxu0 %v403
      %451 = vmatprep.subr.mxu0 0.0
      %452 = vmatpush1.msra.mxu0 %v402
      %453 = vmatprep.subr.mxu0 0.0
      %454 = vmatpush1.msra.mxu0 %v401
      %455 = vmatprep.subr.mxu0 0.0
      %456 = vmatpush1.msra.mxu0 %v400
      %457 = vmatprep.subr.mxu0 0.0
      %458 = vmatpush1.msra.mxu0 %v399
      %459 = vmatprep.subr.mxu0 0.0
      %460 = vmatpush2.msra.mxu0 0.0
      %461 = vmatprep.subr.mxu0 0.0
      %462 = vmatpush2.msra.mxu0 0.0
      %463 = vmatprep.subr.mxu0 0.0
      %464 = vmatpush2.msra.mxu0 0.0
      %465 = vmatprep.subr.mxu0 0.0
      %466 = vmatpush2.msra.mxu0 0.0
      %467 = vmatprep.subr.mxu0 0.0
      %468 = vmatpush2.msra.mxu0 0.0
      %469 = vmatprep.subr.mxu0 0.0
      %470 = vmatpush2.msra.mxu0 0.0
      %471 = vmatprep.subr.mxu0 0.0
      %472 = vmatpush2.msra.mxu0 0.0
      %473 = vmatprep.subr.mxu0 0.0
      %474 = vmatpush2.msra.mxu0 0.0
      %475 = vmatprep.subr.mxu0 0.0
      %476 = vmatpush2.msra.mxu0 0.0
      %477 = vmatprep.subr.mxu0 0.0
      %478 = vmatpush2.msra.mxu0 0.0
      %479 = vmatprep.subr.mxu0 0.0
      %480 = vmatpush2.msra.mxu0 0.0
      %481 = vmatprep.subr.mxu0 0.0
      %482 = vmatpush2.msra.mxu0 0.0
      %483 = vmatprep.subr.mxu0 0.0
      %484 = vmatpush2.msra.mxu0 0.0
      %485 = vmatprep.subr.mxu0 0.0
      %486 = vmatpush2.msra.mxu0 0.0
      %487 = vmatprep.subr.mxu0 0.0
      %488 = vmatpush2.msra.mxu0 0.0
      %489 = vmatprep.subr.mxu0 0.0
      %490 = vmatpush2.msra.mxu0 0.0
      %491 = vmatprep.mubr.f32.mxu0 0.0
      %492 = vmatmul.mubr.f32.gmra.mxu0 %v416
      %v493 = vpop.f32.mrf.mxu0
      %v494 = vadd.f32 %v412, %v493
      %v495 = vpop.f32.mrf.mxu0
      %496 = vmatprep.mubr.f32.mxu0 0.0
      %497 = vmatmul.mubr.f32.gmra.mxu0 %v419
      %v498 = vpop.f32.mrf.mxu0
      %v499 = vadd.f32 %v412, %v498
      %v500 = vpop.f32.mrf.mxu0
      %501 = vmatprep.mubr.f32.mxu0 0.0
      %502 = vmatmul.mubr.f32.gmra.mxu0 %v422
      %v503 = vpop.f32.mrf.mxu0
      %v504 = vadd.f32 %v412, %v503
      %v505 = vpop.f32.mrf.mxu0
      %506 = vmatprep.mubr.f32.mxu0 0.0
      %507 = vmatmul.mubr.f32.gmra.mxu0 %v425
      %v508 = vpop.f32.mrf.mxu0
      %v509 = vadd.f32 %v412, %v508
      %v510 = vpop.f32.mrf.mxu0
      %511 = vdwg.mxu0
      %v512 = vmax.f32 %v494, 0.0
      %v513 = vmax.f32 %v499, 0.0
      %v514 = vmax.f32 %v504, 0.0
      %v515 = vmax.f32 %v509, 0.0
      %v516 = vld [vmem:[%s5] sm:$0xff]
      %v517 = vld [vmem:[%s5 + $0x8] sm:$0xff]
      %v518 = vld [vmem:[%s5 + $0x10] sm:$0xff]
      %v519 = vld [vmem:[%s5 + $0x18] sm:$0xff]
      %v520 = vld [vmem:[%s5 + $0x20] sm:$0xff]
      %v521 = vld [vmem:[%s5 + $0x28] sm:$0xff]
      %v522 = vld [vmem:[%s5 + $0x30] sm:$0xff]
      %v523 = vld [vmem:[%s5 + $0x38] sm:$0xff]
      %v524 = vld [vmem:[#allocation2] sm:$0x1]
      %v526 = vlaneseq
      %v527 = vshrl.u32 %v526, 7
      %v528 = vsub.s32 0, %v527
      %v529 = vrot.slane %v524, %v528
      %v532 = vsel %vm414, %v512, 0
      %v535 = vsel %vm414, %v513, 0
      %v538 = vsel %vm414, %v514, 0
      %v541 = vsel %vm414, %v515, 0
      %543 = vmatprep.subr.mxu0 0.0
      %544 = vmatpush1.msra.mxu0 0.0
      %545 = vmatprep.subr.mxu0 0.0
      %546 = vmatpush1.msra.mxu0 0.0
      %547 = vmatprep.subr.mxu0 0.0
      %548 = vmatpush1.msra.mxu0 0.0
      %549 = vmatprep.subr.mxu0 0.0
      %550 = vmatpush1.msra.mxu0 0.0
      %551 = vmatprep.subr.mxu0 0.0
      %552 = vmatpush1.msra.mxu0 0.0
      %553 = vmatprep.subr.mxu0 0.0
      %554 = vmatpush1.msra.mxu0 0.0
      %555 = vmatprep.subr.mxu0 0.0
      %556 = vmatpush1.msra.mxu0 0.0
      %557 = vmatprep.subr.mxu0 0.0
      %558 = vmatpush1.msra.mxu0 0.0
      %559 = vmatprep.subr.mxu0 0.0
      %560 = vmatpush1.msra.mxu0 %v523
      %561 = vmatprep.subr.mxu0 0.0
      %562 = vmatpush1.msra.mxu0 %v522
      %563 = vmatprep.subr.mxu0 0.0
      %564 = vmatpush1.msra.mxu0 %v521
      %565 = vmatprep.subr.mxu0 0.0
      %566 = vmatpush1.msra.mxu0 %v520
      %567 = vmatprep.subr.mxu0 0.0
      %568 = vmatpush1.msra.mxu0 %v519
      %569 = vmatprep.subr.mxu0 0.0
      %570 = vmatpush1.msra.mxu0 %v518
      %571 = vmatprep.subr.mxu0 0.0
      %572 = vmatpush1.msra.mxu0 %v517
      %573 = vmatprep.subr.mxu0 0.0
      %574 = vmatpush1.msra.mxu0 %v516
      %575 = vmatprep.subr.mxu0 0.0
      %576 = vmatpush2.msra.mxu0 0.0
      %577 = vmatprep.subr.mxu0 0.0
      %578 = vmatpush2.msra.mxu0 0.0
      %579 = vmatprep.subr.mxu0 0.0
      %580 = vmatpush2.msra.mxu0 0.0
      %581 = vmatprep.subr.mxu0 0.0
      %582 = vmatpush2.msra.mxu0 0.0
      %583 = vmatprep.subr.mxu0 0.0
      %584 = vmatpush2.msra.mxu0 0.0
      %585 = vmatprep.subr.mxu0 0.0
      %586 = vmatpush2.msra.mxu0 0.0
      %587 = vmatprep.subr.mxu0 0.0
      %588 = vmatpush2.msra.mxu0 0.0
      %589 = vmatprep.subr.mxu0 0.0
      %590 = vmatpush2.msra.mxu0 0.0
      %591 = vmatprep.subr.mxu0 0.0
      %592 = vmatpush2.msra.mxu0 0.0
      %593 = vmatprep.subr.mxu0 0.0
      %594 = vmatpush2.msra.mxu0 0.0
      %595 = vmatprep.subr.mxu0 0.0
      %596 = vmatpush2.msra.mxu0 0.0
      %597 = vmatprep.subr.mxu0 0.0
      %598 = vmatpush2.msra.mxu0 0.0
      %599 = vmatprep.subr.mxu0 0.0
      %600 = vmatpush2.msra.mxu0 0.0
      %601 = vmatprep.subr.mxu0 0.0
      %602 = vmatpush2.msra.mxu0 0.0
      %603 = vmatprep.subr.mxu0 0.0
      %604 = vmatpush2.msra.mxu0 0.0
      %605 = vmatprep.subr.mxu0 0.0
      %606 = vmatpush2.msra.mxu0 0.0
      %607 = vmatprep.mubr.f32.mxu0 0.0
      %608 = vmatmul.mubr.f32.gmra.mxu0 %v532
      %v609 = vpop.f32.mrf.mxu0
      %v610 = vadd.f32 %v529, %v609
      %v611 = vpop.f32.mrf.mxu0
      %612 = vmatprep.mubr.f32.mxu0 0.0
      %613 = vmatmul.mubr.f32.gmra.mxu0 %v535
      %v614 = vpop.f32.mrf.mxu0
      %v615 = vadd.f32 %v529, %v614
      %v616 = vpop.f32.mrf.mxu0
      %617 = vmatprep.mubr.f32.mxu0 0.0
      %618 = vmatmul.mubr.f32.gmra.mxu0 %v538
      %v619 = vpop.f32.mrf.mxu0
      %v620 = vadd.f32 %v529, %v619
      %v621 = vpop.f32.mrf.mxu0
      %622 = vmatprep.mubr.f32.mxu0 0.0
      %623 = vmatmul.mubr.f32.gmra.mxu0 %v541
      %v624 = vpop.f32.mrf.mxu0
      %v625 = vadd.f32 %v529, %v624
      %v626 = vpop.f32.mrf.mxu0
      %627 = vdwg.mxu0
      %v628 = vmax.f32 %v610, 0.0
      %v629 = vmax.f32 %v615, 0.0
      %v630 = vmax.f32 %v620, 0.0
      %v631 = vmax.f32 %v625, 0.0
      %vm632 = vcmp.ne.f32.partialorder %v610, %v610
      %vm633 = vcmp.ne.f32.partialorder %v615, %v615
      %vm634 = vcmp.ne.f32.partialorder %v620, %v620
      %vm635 = vcmp.ne.f32.partialorder %v625, %v625
      %v636 = vadd.f32 %v610, 0.0
      %v637 = vadd.f32 %v615, 0.0
      %v638 = vadd.f32 %v620, 0.0
      %v639 = vadd.f32 %v625, 0.0
      %v640 = vand.u32 2147483647, %v610
      %v641 = vand.u32 2147483647, %v615
      %v642 = vand.u32 2147483647, %v620
      %v643 = vand.u32 2147483647, %v625
      %v644 = vsub.f32 0.0, %v640
      %v645 = vsub.f32 0.0, %v641
      %v646 = vsub.f32 0.0, %v642
      %v647 = vsub.f32 0.0, %v643
      %v648 = vmul.f32 %v644, 1.442695
      %v649 = vpow.pop %v648
      %v650 = vmul.f32 %v645, 1.442695
      %v651 = vpow.pop %v650
      %v652 = vmul.f32 %v646, 1.442695
      %v653 = vpow.pop %v652
      %v654 = vmul.f32 %v647, 1.442695
      %v655 = vpow.pop %v654
      %v656 = vadd.f32 %v649, 1.0
      %v657 = vlog2.pop %v656
      %v658 = vmul.f32 %v657, 0.6931472
      %v659 = vmul.f32 -0.5, %v649
      %v660 = vadd.f32 %v659, 1.0
      %v661 = vmul.f32 %v660, %v649
      %v662 = vand.u32 2147483647, %v649
      %vm663 = vcmp.lt.f32.partialorder %v662, 0.0004427343
      %v664 = vsel %vm663, %v661, %v658
      %v665 = vadd.f32 %v651, 1.0
      %v666 = vlog2.pop %v665
      %v667 = vmul.f32 %v666, 0.6931472
      %v668 = vmul.f32 -0.5, %v651
      %v669 = vadd.f32 %v668, 1.0
      %v670 = vmul.f32 %v669, %v651
      %v671 = vand.u32 2147483647, %v651
      %vm672 = vcmp.lt.f32.partialorder %v671, 0.0004427343
      %v673 = vsel %vm672, %v670, %v667
      %v674 = vadd.f32 %v653, 1.0
      %v675 = vlog2.pop %v674
      %v676 = vmul.f32 %v675, 0.6931472
      %v677 = vmul.f32 -0.5, %v653
      %v678 = vadd.f32 %v677, 1.0
      %v679 = vmul.f32 %v678, %v653
      %v680 = vand.u32 2147483647, %v653
      %vm681 = vcmp.lt.f32.partialorder %v680, 0.0004427343
      %v682 = vsel %vm681, %v679, %v676
      %v683 = vadd.f32 %v655, 1.0
      %v684 = vlog2.pop %v683
      %v685 = vmul.f32 %v684, 0.6931472
      %v686 = vmul.f32 -0.5, %v655
      %v687 = vadd.f32 %v686, 1.0
      %v688 = vmul.f32 %v687, %v655
      %v689 = vand.u32 2147483647, %v655
      %vm690 = vcmp.lt.f32.partialorder %v689, 0.0004427343
      %v691 = vsel %vm690, %v688, %v685
      %v692 = vadd.f32 %v628, %v664
      %v693 = vadd.f32 %v629, %v673
      %v694 = vadd.f32 %v630, %v682
      %v695 = vadd.f32 %v631, %v691
      %v696 = vsel %vm632, %v636, %v692
      %v697 = vsel %vm633, %v637, %v693
      %v698 = vsel %vm634, %v638, %v694
      %v699 = vsel %vm635, %v639, %v695
      %v700 = vadd.f32 %v696, 1e-06
      %v701 = vadd.f32 %v697, 1e-06
      %v702 = vadd.f32 %v698, 1e-06
      %v703 = vadd.f32 %v699, 1e-06
      %vm704 = vcmask 7168
      %705 = vst.msk [vmem:[%s282] sm:$0xff] %vm704, %v700
      %706 = vst.msk [vmem:[%s282 + $0x8] sm:$0xff] %vm704, %v701
      %707 = vst.msk [vmem:[%s282 + $0x10] sm:$0xff] %vm704, %v702
      %708 = vst.msk [vmem:[%s282 + $0x18] sm:$0xff] %vm704, %v703
      %s709 = smul.u32 4, %s20
      %p710 = scmp.lt.s32.totalorder %s709, 7
      %s711 = scalar_select %p710, %s709, 7
      %s712 = smul.addr %s711, 8
      %s713 = scalar_lea.vmem %s7, %s712
      // Predicated region
      $region49: #{tpu_custom_call.1} parent=47 // pred_check
        %p714 = pneg %p190
      $region50: #{tpu_custom_call.1} parent=47 // pred_check_branch
        %716 = sbr.rel (%p714) target = $region52
      $region51: #{tpu_custom_call.1} parent=47 // pred_region
        %s717 = smul.u32 4, %s20
      $region52: #{tpu_custom_call.1} parent=47 // pred_fallthru
        _
    $region48: #{tpu_custom_call.1} parent=5 // pred_fallthru
      _
    %p718 = scmp.le.s32.totalorder 2, %s15
    // Predicated region
    $region53: #{tpu_custom_call.1} parent=5 // pred_check
      %p719 = pneg %p718
    $region54: #{tpu_custom_call.1} parent=5 // pred_check_branch
      %721 = sbr.rel (%p719) target = $region56
    $region55: #{tpu_custom_call.1} parent=5 // pred_region
      %s722 = ssub.s32 %s15, 2
      // Predicated region
      $region57: #{tpu_custom_call.1} parent=55 // pred_check
        %p723 = pneg %p196
      $region58: #{tpu_custom_call.1} parent=55 // pred_check_branch
        %725 = sbr.rel (%p723) target = $region60
      $region59: #{tpu_custom_call.1} parent=55 // pred_region
        %s726 = smul.u32 4, %s21
        %p727 = scmp.lt.s32.totalorder %s726, 7
        %s728 = scalar_select %p727, %s726, 7
        %s729 = smul.addr %s728, 8
        %s730 = scalar_lea.vmem %s7, %s729
      $region60: #{tpu_custom_call.1} parent=55 // pred_fallthru
        _
    $region56: #{tpu_custom_call.1} parent=5 // pred_fallthru
      _
  $region6: #{tpu_custom_call.1} parent=0 // loop_footer
    %s19 = sadd.s32 1, %s15
  $region7: #{tpu_custom_call.1} parent=0 // loop_footer_branch
    %14 = sbr.rel target = $region3
  $region8: #{tpu_custom_call.1} parent=0 // loop_exit
    _

</llo_original>
